<compile_context>
chip_gen: v5e
topology: v5e:2x2
jax: 0.10.0
libtpu: 0.0.40
codegen_flags: <defaults>
</compile_context>

<pallas_src>
import math
from typing import NamedTuple, Optional

import jax
import jax.numpy as jnp
from jax.experimental import pallas as pl
from jax.experimental.pallas import tpu as pltpu


# --------------------------------------------------------------------------
# small helpers
# --------------------------------------------------------------------------
def _round_up(x: int, m: int) -> int:
    return ((x + m - 1) // m) * m


def _largest_divisor(n: int, *, unit: int, cap: int,
                     min_ok: Optional[int] = None) -> Optional[int]:
    """Largest t <= cap with t % unit == 0 and n % t == 0 (None if < min_ok)."""
    cap = min(cap, n)
    cap -= cap % unit
    for t in range(cap, unit - 1, -unit):
        if n % t == 0:
            if min_ok is not None and t < min_ok:
                return None
            return t
    return None


_K_SPLIT_THRESHOLD = 4096   # keep the whole reduction in one block up to this
_K_SPLIT_TILE = 512         # tile_k when K is split (multiple of 128 and 256)


# --------------------------------------------------------------------------
# kernels
# --------------------------------------------------------------------------
def _mlp_kernel_single_k(x_ref, w_ref, b_ref, o_ref):
    """Whole K reduction in one block: dot -> +bias -> LeakyReLU -> store."""
    y = jnp.dot(x_ref[...], w_ref[...], preferred_element_type=jnp.float32)
    y = y + b_ref[...].astype(jnp.float32)
    o_ref[...] = jnp.where(y >= 0, y, 0.2 * y).astype(o_ref.dtype)


def _mlp_kernel_split_k(x_ref, w_ref, b_ref, o_ref, acc_ref):
    """K split over the last ('arbitrary') grid axis, f32 VMEM accumulator."""
    k = pl.program_id(2)
    p = jnp.dot(x_ref[...], w_ref[...], preferred_element_type=jnp.float32)

    @pl.when(k == 0)
    def _first():
        acc_ref[...] = p                       # direct store, no zero-init pass

    @pl.when(k > 0)
    def _accum():
        acc_ref[...] += p

    @pl.when(k == pl.num_programs(2) - 1)
    def _finalize():
        y = acc_ref[...] + b_ref[...].astype(jnp.float32)
        o_ref[...] = jnp.where(y >= 0, y, 0.2 * y).astype(o_ref.dtype)


# --------------------------------------------------------------------------
# parameters (pre-transposed, pre-padded, pre-cast once at init)
# --------------------------------------------------------------------------
class MLPLayerParams(NamedTuple):
    weight_t: jax.Array    # (K_pad, N_pad) compute dtype (bf16 by default)
    bias: jax.Array        # (1, N_pad) float32, zero padded
    in_features: int
    out_features: int


def init_mlp_layer_params(key, in_features, out_features, *, is_first=False,
                          bias=True, compute_dtype=jnp.bfloat16):
    """Matches MLPLayer.__init__/init_weights; weight stored [in, out]."""
    kw, kb = jax.random.split(key)
    if is_first:
        bound = 1.0 / in_features
    else:
        # nn.init.calculate_gain('leaky_relu', 0.2) = sqrt(2 / (1 + 0.2^2))
        gain = math.sqrt(2.0 / (1.0 + 0.2 ** 2))
        bound = gain * math.sqrt(6.0 / (in_features + out_features))
    w_t = jax.random.uniform(kw, (in_features, out_features), jnp.float32,
                             -bound, bound)
    if bias:
        b_bound = 1.0 / math.sqrt(in_features)
        b = jax.random.uniform(kb, (out_features,), jnp.float32,
                               -b_bound, b_bound)
    else:
        b = jnp.zeros((out_features,), jnp.float32)

    # Static padding done once here (never in the forward hot path).
    n_pad = _round_up(out_features, 128)
    k_pad = (in_features if in_features <= _K_SPLIT_THRESHOLD
             else _round_up(in_features, _K_SPLIT_TILE))
    w_t = jnp.pad(w_t, ((0, k_pad - in_features), (0, n_pad - out_features)))
    b2 = jnp.pad(b.reshape(1, -1), ((0, 0), (0, n_pad - out_features)))
    return MLPLayerParams(weight_t=w_t.astype(compute_dtype),
                          bias=b2.astype(jnp.float32),
                          in_features=in_features,
                          out_features=out_features)


# --------------------------------------------------------------------------
# forward
# --------------------------------------------------------------------------
def mlp_layer_forward(x, params: MLPLayerParams, *,
                      tile_m=None, tile_n=None, tile_k=None,
                      out_dtype=None,
                      vmem_budget_bytes=40 * 1024 * 1024):
    """Fused y = LeakyReLU_{0.2}(x @ weight_t + bias)."""
    M, K = x.shape
    K_pad, N_pad = params.weight_t.shape
    N = params.out_features
    assert K == params.in_features, "x last dim must equal in_features"

    cdt = params.weight_t.dtype
    if out_dtype is None:
        out_dtype = x.dtype
    xb = jnp.dtype(cdt).itemsize           # compute-dtype bytes (x, w)
    ob = jnp.dtype(out_dtype).itemsize
    sublane = 16 if xb == 2 else 8         # bf16 packs 16 rows/sublane tile

    # ---- K tiling ---------------------------------------------------------
    if tile_k is None:
        tile_k = _K_SPLIT_TILE if K_pad > _K_SPLIT_THRESHOLD else K_pad
    split_k = tile_k < K_pad
    if split_k:
        assert K_pad % tile_k == 0 and tile_k % 128 == 0

    # ---- N tiling (N_pad is a multiple of 128 by construction) -------------
    if tile_n is None:
        tile_n = _largest_divisor(N_pad, unit=128, cap=512)
    assert N_pad % tile_n == 0 and tile_n % 128 == 0

    # ---- M tiling, capped by the VMEM working-set budget -------------------
    fixed = 2 * tile_k * tile_n * xb + 2 * tile_n * 4          # weight + bias
    per_row = 2 * tile_k * xb + 2 * tile_n * ob                # x + out per M row
    if split_k:
        per_row += 4 * tile_n                                  # f32 accumulator
    cap_m = max(sublane, min((vmem_budget_bytes - fixed) // per_row, 2048))
    cap_m -= cap_m % sublane

    if tile_m is None:
        if M <= cap_m:
            tile_m = M                      # single block: full-dim escape hatch
        else:
            m_base = _round_up(M, sublane)  # minimal padding only
            tile_m = _largest_divisor(m_base, unit=sublane, cap=cap_m,
                                      min_ok=min(256, cap_m))
            if tile_m is None:              # awkward M: fall back to padding
                tile_m = min(cap_m, 512)
    M_pad = _round_up(M, tile_m)
    assert tile_m == M_pad or tile_m % 8 == 0

    # ---- derive an explicit VMEM limit from the actual working set ---------
    ws = fixed + tile_m * per_row
    vmem_limit = min(96 * 1024 * 1024,
                     max(32 * 1024 * 1024, int(ws * 1.25) + (2 << 20)))

    # ---- prepare x (cast once; pad only if genuinely required) -------------
    x_c = x if x.dtype == cdt else x.astype(cdt)
    if (M_pad != M) or (K_pad != K):
        x_c = jnp.pad(x_c, ((0, M_pad - M), (0, K_pad - K)))

    # NOTE(v7x): "parallel" on the M/N axes enables megacore sharding across
    # the 2 TensorCores; verify in a profile and switch to CORE_PARALLEL on
    # the leading axis if only one core is busy.
    if not split_k:
        grid = (M_pad // tile_m, N_pad // tile_n)
        out = pl.pallas_call(
            _mlp_kernel_single_k,
            out_shape=jax.ShapeDtypeStruct((M_pad, N_pad), out_dtype),
            grid_spec=pltpu.PrefetchScalarGridSpec(
                num_scalar_prefetch=0,
                grid=grid,
                in_specs=[
                    pl.BlockSpec((tile_m, tile_k), lambda i, j: (i, 0)),
                    pl.BlockSpec((tile_k, tile_n), lambda i, j: (0, j)),
                    pl.BlockSpec((1, tile_n), lambda i, j: (0, j)),
                ],
                out_specs=pl.BlockSpec((tile_m, tile_n), lambda i, j: (i, j)),
            ),
            compiler_params=pltpu.CompilerParams(
                dimension_semantics=("parallel", "parallel"),
                vmem_limit_bytes=vmem_limit,
            ),
        )(x_c, params.weight_t, params.bias)
    else:
        grid = (M_pad // tile_m, N_pad // tile_n, K_pad // tile_k)
        out = pl.pallas_call(
            _mlp_kernel_split_k,
            out_shape=jax.ShapeDtypeStruct((M_pad, N_pad), out_dtype),
            grid_spec=pltpu.PrefetchScalarGridSpec(
                num_scalar_prefetch=0,
                grid=grid,
                in_specs=[
                    pl.BlockSpec((tile_m, tile_k), lambda i, j, k: (i, k)),
                    pl.BlockSpec((tile_k, tile_n), lambda i, j, k: (k, j)),
                    pl.BlockSpec((1, tile_n), lambda i, j, k: (0, j)),
                ],
                out_specs=pl.BlockSpec((tile_m, tile_n), lambda i, j, k: (i, j)),
                scratch_shapes=[pltpu.VMEM((tile_m, tile_n), jnp.float32)],
            ),
            compiler_params=pltpu.CompilerParams(
                dimension_semantics=("parallel", "parallel", "arbitrary"),
                vmem_limit_bytes=vmem_limit,
            ),
        )(x_c, params.weight_t, params.bias)

    if (M_pad != M) or (N_pad != N):
        out = out[:M, :N]
    return out


# --------------------------------------------------------------------------
# reference (same rounded weights; f32 math)
# --------------------------------------------------------------------------
def _reference(x, params: MLPLayerParams):
    K, N = params.in_features, params.out_features
    w = params.weight_t[:K, :N].astype(jnp.float32)
    b = params.bias[0, :N].astype(jnp.float32)
    xc = x.astype(params.weight_t.dtype).astype(jnp.float32)
    y = xc @ w + b
    return jnp.where(y >= 0, y, 0.2 * y)


# --------------------------------------------------------------------------
# demo / checks
# --------------------------------------------------------------------------
if __name__ == "__main__":
    key = jax.random.PRNGKey(0)
    k_x1, k_p1, k_x2, k_p2, k_x3, k_p3 = jax.random.split(key, 6)

    # 1) small shapes consistent with the module (default bf16 compute path)
    x1 = jax.random.normal(k_x1, (8, 32), jnp.float32)
    p1 = init_mlp_layer_params(k_p1, 32, 64, is_first=False)
    o1 = jax.block_until_ready(mlp_layer_forward(x1, p1))
    r1 = _reference(x1, p1)
    assert o1.shape == r1.shape == (8, 64)
    assert jnp.allclose(o1, r1, atol=2e-3, rtol=2e-3), "small-shape mismatch"

    # 2) unaligned M / N: no x padding (full-dim M block), minimal N pad 300->384
    x2 = jax.random.normal(k_x2, (600, 96), jnp.float32)
    p2 = init_mlp_layer_params(k_p2, 96, 300, is_first=True)
    o2 = jax.block_until_ready(mlp_layer_forward(x2, p2))
    r2 = _reference(x2, p2)
    assert o2.shape == r2.shape == (600, 300)
    assert jnp.allclose(o2, r2, atol=2e-3, rtol=2e-3), "unaligned-shape mismatch"

    # 3) forced split-K: exercises the accumulator kernel (k==0 direct store)
    x3 = jax.random.normal(k_x3, (64, 512), jnp.float32)
    p3 = init_mlp_layer_params(k_p3, 512, 256, is_first=False)
    o3 = jax.block_until_ready(mlp_layer_forward(x3, p3, tile_k=128))
    r3 = _reference(x3, p3)
    assert o3.shape == r3.shape == (64, 256)
    assert jnp.allclose(o3, r3, atol=2e-3, rtol=2e-3), "split-K mismatch"

    print("KERNEL_OK")
</pallas_src>

<mosaic_0001>
module attributes {stable_mosaic.version = 11 : i64} {
  func.func @_mlp_kernel_single_k(%arg0: i32, %arg1: i32, %arg2: memref<8x32xbf16, #tpu.memory_space<vmem>>, %arg3: memref<32x128xbf16, #tpu.memory_space<vmem>>, %arg4: memref<1x128xf32, #tpu.memory_space<vmem>>, %arg5: memref<8x128xf32, #tpu.memory_space<vmem>>) attributes {dimension_semantics = [#tpu.dimension_semantics<parallel>, #tpu.dimension_semantics<parallel>], iteration_bounds = array<i64: 1, 1>, scalar_prefetch = 0 : i64, scratch_operands = 0 : i64, tpu.core_type = #tpu.core_type<tc>, window_params = [{transform_indices = @transform_0, window_bounds = array<i64: 8, 32>}, {transform_indices = @transform_1, window_bounds = array<i64: 32, 128>}, {transform_indices = @transform_2, window_bounds = array<i64: 1, 128>}, {transform_indices = @transform_3, window_bounds = array<i64: 8, 128>}]} {
    %c0 = arith.constant 0 : index
    %c0_0 = arith.constant 0 : index
    %0 = vector.load %arg2[%c0, %c0_0] : memref<8x32xbf16, #tpu.memory_space<vmem>>, vector<8x32xbf16>
    %c0_1 = arith.constant 0 : index
    %c0_2 = arith.constant 0 : index
    %1 = vector.load %arg3[%c0_1, %c0_2] : memref<32x128xbf16, #tpu.memory_space<vmem>>, vector<32x128xbf16>
    %cst = arith.constant dense<0.000000e+00> : vector<8x128xf32>
    %2 = tpu.matmul %0, %1, %cst {dimension_numbers = #tpu.dot_dimension_numbers<[1], [0], [0], [1], [0, 0, 1, 1], [], []>} : vector<8x32xbf16>, vector<32x128xbf16>, vector<8x128xf32> -> vector<8x128xf32>
    %c0_3 = arith.constant 0 : index
    %c0_4 = arith.constant 0 : index
    %3 = vector.load %arg4[%c0_3, %c0_4] : memref<1x128xf32, #tpu.memory_space<vmem>>, vector<1x128xf32>
    %4 = vector.broadcast %3 : vector<1x128xf32> to vector<8x128xf32>
    %5 = arith.addf %2, %4 : vector<8x128xf32>
    %cst_5 = arith.constant 0.000000e+00 : f32
    %6 = vector.broadcast %cst_5 : f32 to vector<8x128xf32>
    %7 = arith.cmpf oge, %5, %6 : vector<8x128xf32>
    %cst_6 = arith.constant 2.000000e-01 : f32
    %8 = vector.broadcast %cst_6 : f32 to vector<8x128xf32>
    %9 = arith.mulf %8, %5 : vector<8x128xf32>
    %10 = arith.select %7, %5, %9 : vector<8x128xi1>, vector<8x128xf32>
    %c0_7 = arith.constant 0 : index
    %c0_8 = arith.constant 0 : index
    %11 = vector.load %arg5[%c0_7, %c0_8] : memref<8x128xf32, #tpu.memory_space<vmem>>, vector<8x128xf32>
    tpu.vector_store %arg5[%c0_7, %c0_8], %10 {strides = array<i32>} : memref<8x128xf32, #tpu.memory_space<vmem>>, vector<8x128xf32>,
    return
  }
  func.func @transform_0(%arg0: i32, %arg1: i32) -> (i32, i32) {
    %c0_i32 = arith.constant 0 : i32
    %c0_i32_0 = arith.constant 0 : i32
    return %arg0, %c0_i32 : i32, i32
  }
  func.func @transform_1(%arg0: i32, %arg1: i32) -> (i32, i32) {
    %c0_i32 = arith.constant 0 : i32
    %c0_i32_0 = arith.constant 0 : i32
    return %c0_i32, %arg1 : i32, i32
  }
  func.func @transform_2(%arg0: i32, %arg1: i32) -> (i32, i32) {
    %c0_i32 = arith.constant 0 : i32
    %c0_i32_0 = arith.constant 0 : i32
    return %c0_i32, %arg1 : i32, i32
  }
  func.func @transform_3(%arg0: i32, %arg1: i32) -> (i32, i32) {
    %c0_i32 = arith.constant 0 : i32
    return %arg0, %arg1 : i32, i32
  }
}

</mosaic_0001>

<llo_original>
// kernel: tpu_custom_call.1
$region0: #{tpu_custom_call.1}
  #allocation0 [shape = 'u32[]', space=smem, size = 0x4, offset = 0x4, fixed_abs, tag = 'smem constant byte address 0x4 - core index']
  #allocation1 [shape = 'u32[72,128]{1,0:T(1,128)}', space=vmem, size = 0x9000, scoped, tag = 'internal scratch']
  %s0 = inlined_call_operand.hbm [shape: bf16[8,32], index: 0, kind: input, shape index: {}]
  %s1 = inlined_call_operand.hbm [shape: bf16[32,128], index: 1, kind: input, shape index: {}]
  %s2 = inlined_call_operand.vmem [shape: f32[1,128], index: 2, kind: input, shape index: {}]
  %s3 = inlined_call_operand.hbm [shape: f32[8,128], index: 3, kind: output, shape index: {}]
  %s4 = sld [smem:[#allocation0]]
  $region30: #{tpu_custom_call.1} parent=0
    _
  %s6 = ssub.s32 1, %s4
  %s7 = scalar_select 0, %s6, %s4
  $region1: #{tpu_custom_call.1} parent=0
    #allocation2 [shape = 'u8[2048]{0}', space=vmem, size = 0x800, scoped, tag = 'input window, operand 0, single buffered']
    #allocation3 [shape = 's32[1]{0}', space=sflag, size = 0x4, scoped, tag = 'scoped memory for tpu_custom_call.1']
    #allocation4 [shape = 's32[1]{0}', space=sflag, size = 0x4, scoped, tag = 'scoped memory for tpu_custom_call.1']
    #allocation5 [shape = 'u8[8192]{0}', space=vmem, size = 0x2000, scoped, tag = 'input window, operand 1, single buffered']
    #allocation6 [shape = 's32[1]{0}', space=sflag, size = 0x4, scoped, tag = 'scoped memory for tpu_custom_call.1']
    #allocation7 [shape = 'u8[4096]{0}', space=vmem, size = 0x1000, scoped, tag = 'output window, operand 0, single buffered']
    %8 = vsyncpa [#allocation3], 0
    %9 = vsyncpa [#allocation6], 0
    %10 = vsyncpa [#allocation4], 0
    // Predicated region
    $region2: #{tpu_custom_call.1} parent=1 // pred_check
      _
    $region3: #{tpu_custom_call.1} parent=1 // pred_check_branch
      %12 = sbr.rel (0) target = $region5
    $region4: #{tpu_custom_call.1} parent=1 // pred_region
      %14 = vsyncadd [#allocation3], 0
      %s16 = sshll.u32 %s0, 4
      %s17 = int_to_ptr.hbm [resolvable:$true] %s16
      %s18 = sshll.u32 [#allocation2], 4
      %s19 = int_to_ptr.vmem [resolvable:$true] %s18
      %21 = dma.hbm_to_vmem [thread:$0]  %s17, 64, %s19, [#allocation3]
    $region5: #{tpu_custom_call.1} parent=1 // pred_fallthru
      _
    // Predicated region
    $region6: #{tpu_custom_call.1} parent=1 // pred_check
      _
    $region7: #{tpu_custom_call.1} parent=1 // pred_check_branch
      %23 = sbr.rel (0) target = $region9
    $region8: #{tpu_custom_call.1} parent=1 // pred_region
      %25 = vsyncadd [#allocation6], 0
      %s26 = sshll.u32 %s1, 4
      %s27 = int_to_ptr.hbm [resolvable:$true] %s26
      %s28 = sshll.u32 [#allocation5], 4
      %s29 = int_to_ptr.vmem [resolvable:$true] %s28
      %34 = dma.hbm_to_vmem [thread:$0]  %s27, 256, %s29, [#allocation6], 64, 64, 4
    $region9: #{tpu_custom_call.1} parent=1 // pred_fallthru
      _
    // Predicated region
    $region10: #{tpu_custom_call.1} parent=1 // pred_check
      _
    $region11: #{tpu_custom_call.1} parent=1 // pred_check_branch
      %36 = sbr.rel (0) target = $region13
    $region12: #{tpu_custom_call.1} parent=1 // pred_region
      _
    $region13: #{tpu_custom_call.1} parent=1 // pred_fallthru
      _
    // Predicated region
    $region14: #{tpu_custom_call.1} parent=1 // pred_check
      _
    $region15: #{tpu_custom_call.1} parent=1 // pred_check_branch
      %38 = sbr.rel (0) target = $region17
    $region16: #{tpu_custom_call.1} parent=1 // pred_region
      %40 = dma.done [#allocation3], 64
    $region17: #{tpu_custom_call.1} parent=1 // pred_fallthru
      _
    // Predicated region
    $region18: #{tpu_custom_call.1} parent=1 // pred_check
      _
    $region19: #{tpu_custom_call.1} parent=1 // pred_check_branch
      %42 = sbr.rel (0) target = $region21
    $region20: #{tpu_custom_call.1} parent=1 // pred_region
      %44 = dma.done [#allocation6], 256
    $region21: #{tpu_custom_call.1} parent=1 // pred_fallthru
      _
    %v46 = vld [vmem:[#allocation2] sm:$0xf]
    %v47 = vld [vmem:[#allocation5] sm:$0xf]
    %v48 = vld [vmem:[#allocation5 + $0x4] sm:$0xf]
    %v49 = vld [vmem:[#allocation5 + $0x8] sm:$0xf]
    %v50 = vld [vmem:[#allocation5 + $0xc] sm:$0xf]
    %v51 = vld [vmem:[%s2] sm:$0x1]
    %v53 = vperm.slane %v51, 0
    %v59 = vunpack.c.l.b16 %v47
    %v60 = vunpack.c.l.b16 %v48
    %v61 = vunpack.c.l.b16 %v49
    %v62 = vunpack.c.l.b16 %v50
    %v63 = vpack.c.b16 %v60, %v59
    %v64 = vpack.c.b16 %v62, %v61
    %vm67 = vcmask 261120
    %v69 = vsel %vm67, %v46, 0
    %71 = vmatpush.bf16.msra.mxu0 0
    %72 = vmatpush.bf16.msra.mxu0 0
    %73 = vmatpush.bf16.msra.mxu0 0
    %74 = vmatpush.bf16.msra.mxu0 0
    %75 = vmatpush.bf16.msra.mxu0 0
    %76 = vmatpush.bf16.msra.mxu0 0
    %77 = vmatpush.bf16.msra.mxu0 %v64
    %78 = vmatpush.bf16.msra.mxu0 %v63
    %79 = vmatmul.bf16.gmra.mxu0 %v69
    %v80 = vpop.f32.mrf.mxu0
    %v81 = vadd.f32 %v53, %v80
    %v82 = vpop.f32.mrf.mxu0
    %83 = vdwg.mxu0
    %vm84 = vcmp.ge.f32.partialorder %v81, 0.0
    %v85 = vmul.f32 %v81, 0.2
    %v86 = vsel %vm84, %v81, %v85
    %87 = vst [vmem:[#allocation7] sm:$0xff] %v86
    // Predicated region
    $region22: #{tpu_custom_call.1} parent=1 // pred_check
      _
    $region23: #{tpu_custom_call.1} parent=1 // pred_check_branch
      %89 = sbr.rel (0) target = $region25
    $region24: #{tpu_custom_call.1} parent=1 // pred_region
      %91 = vsyncadd [#allocation4], 0
      %s93 = sshll.u32 [#allocation7], 4
      %s94 = int_to_ptr.vmem [resolvable:$true] %s93
      %s95 = sshll.u32 %s3, 4
      %s96 = int_to_ptr.hbm [resolvable:$true] %s95
      %98 = dma.vmem_to_hbm [thread:$0]  %s94, 128, %s96, [#allocation4]
    $region25: #{tpu_custom_call.1} parent=1 // pred_fallthru
      _
    // Predicated region
    $region26: #{tpu_custom_call.1} parent=1 // pred_check
      _
    $region27: #{tpu_custom_call.1} parent=1 // pred_check_branch
      %100 = sbr.rel (0) target = $region29
    $region28: #{tpu_custom_call.1} parent=1 // pred_region
      %102 = dma.done [#allocation4], 128
    $region29: #{tpu_custom_call.1} parent=1 // pred_fallthru
      _
    %103 = vsyncpa [#allocation3], 1
    %104 = vsyncpa [#allocation6], 1
    %105 = vsyncpa [#allocation4], 1

</llo_original>
